<compile_context>
chip_gen: v7x
topology: tpu7x:2x2x1
jax: 0.10.0
libtpu: 0.0.40
codegen_flags: <defaults>
</compile_context>

<pallas_src>
import functools

import jax
import jax.numpy as jnp
from jax.experimental import pallas as pl
from jax.experimental.pallas import tpu as pltpu


# --------------------------------------------------------------------------
# Kernel 1 (scale_factor <= 1): 1x1 conv (channel reduction) + sigmoid,
# tiled over the flattened HW (lane) axis.
# --------------------------------------------------------------------------
def _conv1x1_sigmoid_kernel(x_ref, w_ref, b_ref, o_ref):
    """x_ref: (1, C, THW) VMEM, w_ref: (C, 1) VMEM f32, b_ref: (1, 1) SMEM f32,
    o_ref: (1, 1, THW) VMEM."""
    x = x_ref[0]                       # (C, THW), native dtype (promoted in mul)
    w = w_ref[...]                     # (C, 1) f32
    # VPU multiply + sublane/XLU reduce instead of a wasteful M=1 MXU matmul.
    y = jnp.sum(x * w, axis=0, keepdims=True) + b_ref[0, 0]   # (1, THW) f32
    o_ref[0] = jax.nn.sigmoid(y).astype(o_ref.dtype)


# --------------------------------------------------------------------------
# Kernel 2 (scale_factor > 1): fused channel-reduction + separable bilinear
# upsample + sigmoid.  Grid = (B, oH tiles).
#   out[b, jtile] = sigmoid(Ay[jtile] @ (sum_c w_c x[b,c] + bias) @ Ax^T)
# --------------------------------------------------------------------------
def _fused_ph_kernel(x_ref, w_ref, b_ref, ay_ref, axt_ref, o_ref, y_sc):
    """x_ref: (1, C, H, W) native dtype, w_ref: (C, 1, 1) f32,
    b_ref: (1, 1) SMEM f32, ay_ref: (TOH, H) f32, axt_ref: (W, oW) f32,
    o_ref: (1, TOH, oW), y_sc: (H, W) f32 scratch."""
    j = pl.program_id(1)

    # Channel reduction once per batch element (first oH tile only); the
    # x block index is constant across j, so x is DMA'd only when i changes.
    @pl.when(j == 0)
    def _():
        x = x_ref[0]                                     # (C, H, W)
        w = w_ref[...]                                   # (C, 1, 1) f32
        y_sc[...] = jnp.sum(x * w, axis=0) + b_ref[0, 0]  # (H, W) f32

    # Separable bilinear interp on the MXU for this oH tile.
    t = jnp.dot(ay_ref[...], y_sc[...], preferred_element_type=jnp.float32)  # (TOH, W)
    out = jnp.dot(t, axt_ref[...], preferred_element_type=jnp.float32)       # (TOH, oW)
    o_ref[0] = jax.nn.sigmoid(out).astype(o_ref.dtype)
    # TODO(synk): at B==1 on v7x the second TensorCore is idle (oH axis must be
    # "arbitrary" because of the scratch carry); recomputing the reduction per
    # oH tile would allow a fully parallel grid there.


# --------------------------------------------------------------------------
# Helpers
# --------------------------------------------------------------------------
def _interp_matrix(in_size, out_size):
    """(out_size, in_size) bilinear interp weights, align_corners=True
    (matches nn.Upsample(mode='bilinear', align_corners=True))."""
    if out_size == 1:
        src = jnp.zeros((1,), jnp.float32)
    else:
        src = jnp.arange(out_size, dtype=jnp.float32) * (
            (in_size - 1) / (out_size - 1))
    i0 = jnp.clip(jnp.floor(src).astype(jnp.int32), 0, in_size - 1)
    i1 = jnp.clip(i0 + 1, 0, in_size - 1)
    w1 = src - i0.astype(jnp.float32)
    w0 = 1.0 - w1
    return (jax.nn.one_hot(i0, in_size, dtype=jnp.float32) * w0[:, None]
            + jax.nn.one_hot(i1, in_size, dtype=jnp.float32) * w1[:, None])


def _vmem_budgets():
    """Generation-aware (scoped VMEM limit, tile budget).
    v5e/v6e (128 MiB physical): 64 MiB limit / 48 MiB tile budget.
    v7x (64 MiB physical): 32 MiB limit / 24 MiB tile budget."""
    try:
        phys = int(getattr(pltpu.get_tpu_info(), "vmem_capacity_bytes",
                           64 * 1024 * 1024))
    except Exception:
        phys = 64 * 1024 * 1024
    phys = max(phys, 32 * 1024 * 1024)
    limit = min(phys // 2, 64 * 1024 * 1024)
    return limit, (limit * 3) // 4


def _pick_thw(hw, c, x_itemsize, out_itemsize, budget):
    """Largest HW tile (multiple of 128, or full HW) within the VMEM budget.
    Budgets the double-buffered input/output tiles AND the f32 product temp
    from the promoted `x * w`."""
    per_col = 2 * c * x_itemsize + 2 * out_itemsize + c * 4
    cap = min(budget // per_col, 32768)
    cap = max(128, (cap // 128) * 128)
    if hw <= cap:
        return hw                                   # full dim: always legal
    lo = max(cap // 2, 1024)                        # never collapse to tiny tiles
    for cand in range(cap, lo - 1, -128):           # prefer a divisor of hw
        if hw % cand == 0:
            return cand
    return cap                                      # ragged tail handled by Pallas


def _pick_toh(oh, ow, h, w, c, x_itemsize, out_itemsize, budget):
    """oH tile (multiple of 8, or full oH) for the fused kernel."""
    # Fixed residents: double-buffered x tile, single-buffered Ax^T, the (H, W)
    # scratch, and the f32 reduce temp from the promoted `x * w`.
    fixed = (2 * c * h * w * x_itemsize + w * ow * 4
             + h * w * 4 + c * h * w * 4)
    # Per output row: double-buffered Ay rows + double-buffered output rows +
    # live (row, W) and (row, oW) f32 temps.
    per_row = 2 * h * 4 + 2 * ow * out_itemsize + (w + ow) * 4
    avail = max(budget - fixed, 8 * per_row)
    cap = min(oh, avail // per_row)
    if cap >= oh:
        return oh
    cap = max(8, (cap // 8) * 8)
    lo = max(cap // 2, 8)
    for cand in range(cap, lo - 1, -8):             # prefer a divisor of oh
        if oh % cand == 0:
            return cand
    return cap


# --------------------------------------------------------------------------
# Wrapper
# --------------------------------------------------------------------------
@functools.partial(jax.jit, static_argnames=("scale_factor",))
def ph_block(x, weight, bias, *, scale_factor=1):
    """x: (B, C, H, W) NCHW. weight: (1, C, 1, 1). bias: (1,).
    Returns (B, 1, H*s, W*s), matching PH_Block.forward."""
    b, c, h, w = x.shape
    vmem_limit, tile_budget = _vmem_budgets()
    b_s = bias.reshape(1, 1).astype(jnp.float32)

    if scale_factor <= 1:
        # ---- conv(1x1) + sigmoid, tiled over HW ----
        hw = h * w
        x_flat = x.reshape(b, c, hw)
        w_col = weight.reshape(c, 1).astype(jnp.float32)
        thw = _pick_thw(hw, c, jnp.dtype(x.dtype).itemsize,
                        jnp.dtype(x.dtype).itemsize, tile_budget)
        grid = (b, pl.cdiv(hw, thw))

        out = pl.pallas_call(
            _conv1x1_sigmoid_kernel,
            out_shape=jax.ShapeDtypeStruct((b, 1, hw), x.dtype),
            grid_spec=pltpu.PrefetchScalarGridSpec(
                num_scalar_prefetch=0,
                grid=grid,
                in_specs=[
                    pl.BlockSpec((1, c, thw), lambda i, j: (i, 0, j)),
                    pl.BlockSpec((c, 1), lambda i, j: (0, 0)),
                    pl.BlockSpec((1, 1), lambda i, j: (0, 0),
                                 memory_space=pltpu.MemorySpace.SMEM),
                ],
                out_specs=pl.BlockSpec((1, 1, thw), lambda i, j: (i, 0, j)),
            ),
            compiler_params=pltpu.CompilerParams(
                dimension_semantics=("parallel", "parallel"),
                vmem_limit_bytes=vmem_limit),
        )(x_flat, w_col, b_s)
        return out.reshape(b, 1, h, w)

    # ---- scale_factor > 1: fused conv + bilinear upsample + sigmoid ----
    oh, ow = h * scale_factor, w * scale_factor
    ay = _interp_matrix(h, oh)                     # (oh, h) f32
    axt = _interp_matrix(w, ow).T                  # (w, ow) f32
    w_vol = weight.reshape(c, 1, 1).astype(jnp.float32)

    toh = _pick_toh(oh, ow, h, w, c,
                    jnp.dtype(x.dtype).itemsize, jnp.dtype(x.dtype).itemsize,
                    tile_budget)
    grid = (b, pl.cdiv(oh, toh))

    out = pl.pallas_call(
        _fused_ph_kernel,
        out_shape=jax.ShapeDtypeStruct((b, oh, ow), x.dtype),
        grid_spec=pltpu.PrefetchScalarGridSpec(
            num_scalar_prefetch=0,
            grid=grid,
            in_specs=[
                # x: constant block index across j -> DMA'd once per batch elem.
                pl.BlockSpec((1, c, h, w), lambda i, j: (i, 0, 0, 0)),
                pl.BlockSpec((c, 1, 1), lambda i, j: (0, 0, 0)),
                pl.BlockSpec((1, 1), lambda i, j: (0, 0),
                             memory_space=pltpu.MemorySpace.SMEM),
                pl.BlockSpec((toh, h), lambda i, j: (j, 0)),
                # Ax^T never changes across the grid: single-buffer it.
                pl.BlockSpec((w, ow), lambda i, j: (0, 0),
                             pipeline_mode=pl.Buffered(1)),
            ],
            out_specs=pl.BlockSpec((1, toh, ow), lambda i, j: (i, j, 0)),
            scratch_shapes=[pltpu.VMEM((h, w), jnp.float32)],
        ),
        compiler_params=pltpu.CompilerParams(
            dimension_semantics=("parallel", "arbitrary"),
            vmem_limit_bytes=vmem_limit),
    )(x, w_vol, b_s, ay, axt)

    return out.reshape(b, 1, oh, ow)


# --------------------------------------------------------------------------
# Pure-JAX reference (follows the original torch order: upsample -> conv -> sig)
# --------------------------------------------------------------------------
def _bilinear_upsample_align_corners(x, scale_factor):
    b, c, h, w = x.shape
    oh, ow = h * scale_factor, w * scale_factor
    ys = jnp.linspace(0.0, h - 1.0, oh) if oh > 1 else jnp.zeros((oh,))
    xs = jnp.linspace(0.0, w - 1.0, ow) if ow > 1 else jnp.zeros((ow,))
    y0 = jnp.clip(jnp.floor(ys).astype(jnp.int32), 0, h - 1)
    x0 = jnp.clip(jnp.floor(xs).astype(jnp.int32), 0, w - 1)
    y1 = jnp.clip(y0 + 1, 0, h - 1)
    x1 = jnp.clip(x0 + 1, 0, w - 1)
    wy = (ys - y0.astype(ys.dtype))[:, None]
    wx = (xs - x0.astype(xs.dtype))[None, :]
    g = lambda yi, xi: x[:, :, yi, :][:, :, :, xi]
    top = g(y0, x0) * (1 - wx) + g(y0, x1) * wx
    bot = g(y1, x0) * (1 - wx) + g(y1, x1) * wx
    return (top * (1 - wy) + bot * wy).astype(x.dtype)


def _reference(x, weight, bias, scale_factor=1):
    if scale_factor > 1:
        x = _bilinear_upsample_align_corners(x, scale_factor)
    y = jnp.einsum("bchw,c->bhw", x.astype(jnp.float32),
                   weight.reshape(-1).astype(jnp.float32)) + bias[0]
    return jax.nn.sigmoid(y)[:, None, :, :].astype(x.dtype)


if __name__ == "__main__":
    key = jax.random.PRNGKey(0)
    kx, kw, kb = jax.random.split(key, 3)

    B, C, H, W = 2, 4, 16, 16
    x = jax.random.normal(kx, (B, C, H, W), dtype=jnp.float32)
    # Conv2d(in_channels=C, out_channels=1, kernel_size=1) parameters.
    weight = jax.random.normal(kw, (1, C, 1, 1), dtype=jnp.float32) * 0.1
    bias = jax.random.normal(kb, (1,), dtype=jnp.float32) * 0.1

    # scale_factor = 1 (no upsample)
    out1 = jax.block_until_ready(ph_block(x, weight, bias, scale_factor=1))
    ref1 = _reference(x, weight, bias, scale_factor=1)
    assert out1.shape == (B, 1, H, W), out1.shape
    assert jnp.allclose(out1, ref1, atol=1e-5, rtol=1e-5), float(
        jnp.max(jnp.abs(out1 - ref1)))

    # scale_factor = 2 (bilinear upsample, align_corners=True) -> fused kernel
    out2 = jax.block_until_ready(ph_block(x, weight, bias, scale_factor=2))
    ref2 = _reference(x, weight, bias, scale_factor=2)
    assert out2.shape == (B, 1, 2 * H, 2 * W), out2.shape
    assert jnp.allclose(out2, ref2, atol=1e-5, rtol=1e-5), float(
        jnp.max(jnp.abs(out2 - ref2)))

    print("KERNEL_OK")
</pallas_src>

<mosaic_0001>
module attributes {stable_mosaic.version = 11 : i64} {
  func.func @_conv1x1_sigmoid_kernel(%arg0: i32, %arg1: i32, %arg2: memref<1x4x256xf32, #tpu.memory_space<vmem>>, %arg3: memref<4x1xf32, #tpu.memory_space<vmem>>, %arg4: memref<1x1xf32, #tpu.memory_space<smem>>, %arg5: memref<1x1x256xf32, #tpu.memory_space<vmem>>) attributes {dimension_semantics = [#tpu.dimension_semantics<parallel>, #tpu.dimension_semantics<parallel>], iteration_bounds = array<i64: 2, 1>, scalar_prefetch = 0 : i64, scratch_operands = 0 : i64, tpu.core_type = #tpu.core_type<tc>, window_params = [{transform_indices = @transform_0, window_bounds = array<i64: 1, 4, 256>}, {pipeline_mode = #tpu.pipeline_mode<synchronous>, transform_indices = @transform_1, window_bounds = array<i64: 4, 1>}, {transform_indices = @transform_2, window_bounds = array<i64: 1, 1>}, {transform_indices = @transform_3, window_bounds = array<i64: 1, 1, 256>}]} {
    %c0 = arith.constant 0 : index
    %c0_0 = arith.constant 0 : index
    %c0_1 = arith.constant 0 : index
    %0 = vector.load %arg2[%c0, %c0_0, %c0_1] : memref<1x4x256xf32, #tpu.memory_space<vmem>>, vector<1x4x256xf32>
    %1 = vector.shape_cast %0 : vector<1x4x256xf32> to vector<4x256xf32>
    %c0_2 = arith.constant 0 : index
    %c0_3 = arith.constant 0 : index
    %2 = vector.load %arg3[%c0_2, %c0_3] : memref<4x1xf32, #tpu.memory_space<vmem>>, vector<4x1xf32>
    %3 = vector.broadcast %2 : vector<4x1xf32> to vector<4x256xf32>
    %4 = arith.mulf %1, %3 : vector<4x256xf32>
    %cst = arith.constant dense<0.000000e+00> : vector<256xf32>
    %5 = vector.multi_reduction <add>, %4, %cst [0] : vector<4x256xf32> to vector<256xf32>
    %6 = vector.shape_cast %5 : vector<256xf32> to vector<1x256xf32>
    %c0_4 = arith.constant 0 : index
    %c0_5 = arith.constant 0 : index
    %7 = memref.load %arg4[%c0_4, %c0_5] : memref<1x1xf32, #tpu.memory_space<smem>>
    %8 = vector.broadcast %7 : f32 to vector<1x256xf32>
    %9 = arith.addf %6, %8 : vector<1x256xf32>
    %10 = arith.negf %9 : vector<1x256xf32>
    %11 = math.exp %10 : vector<1x256xf32>
    %cst_6 = arith.constant 1.000000e+00 : f32
    %12 = vector.broadcast %cst_6 : f32 to vector<1x256xf32>
    %13 = arith.addf %12, %11 : vector<1x256xf32>
    %14 = arith.divf %12, %13 : vector<1x256xf32>
    %c0_7 = arith.constant 0 : index
    %c0_8 = arith.constant 0 : index
    %c0_9 = arith.constant 0 : index
    %15 = vector.load %arg5[%c0_7, %c0_8, %c0_9] : memref<1x1x256xf32, #tpu.memory_space<vmem>>, vector<1x1x256xf32>
    %16 = vector.shape_cast %15 : vector<1x1x256xf32> to vector<1x256xf32>
    %17 = vector.shape_cast %14 : vector<1x256xf32> to vector<1x1x256xf32>
    tpu.vector_store %arg5[%c0_7, %c0_8, %c0_9], %17 {strides = array<i32>} : memref<1x1x256xf32, #tpu.memory_space<vmem>>, vector<1x1x256xf32>,
    return
  }
  func.func @transform_0(%arg0: i32, %arg1: i32) -> (i32, i32, i32) {
    %c0_i32 = arith.constant 0 : i32
    %c0_i32_0 = arith.constant 0 : i32
    return %arg0, %c0_i32, %arg1 : i32, i32, i32
  }
  func.func @transform_1(%arg0: i32, %arg1: i32) -> (i32, i32) {
    %c0_i32 = arith.constant 0 : i32
    %c0_i32_0 = arith.constant 0 : i32
    %c0_i32_1 = arith.constant 0 : i32
    return %c0_i32, %c0_i32_0 : i32, i32
  }
  func.func @transform_2(%arg0: i32, %arg1: i32) -> (i32, i32) {
    %c0_i32 = arith.constant 0 : i32
    %c0_i32_0 = arith.constant 0 : i32
    %c0_i32_1 = arith.constant 0 : i32
    return %c0_i32, %c0_i32_0 : i32, i32
  }
  func.func @transform_3(%arg0: i32, %arg1: i32) -> (i32, i32, i32) {
    %c0_i32 = arith.constant 0 : i32
    %c0_i32_0 = arith.constant 0 : i32
    return %arg0, %c0_i32, %arg1 : i32, i32, i32
  }
}

</mosaic_0001>

<llo_original>
// kernel: ph_block.1
$region0: #{ph_block.1}
  #allocation0 [shape = 'u32[]', space=smem, size = 0x4, offset = 0x4, fixed_abs, tag = 'smem constant byte address 0x4 - core index']
  #allocation1 [shape = 'u32[144,128]{1,0:T(1,128)}', space=vmem, size = 0x12000, scoped, tag = 'internal scratch']
  #allocation2 [shape = 'f32[1,1]{1,0:T(1,128)S(6)}', space=smem, size = 0x200, scoped, tag = 'scoped memory for ph_block.1']
  %s0 = inlined_call_operand.vmem [shape: f32[2,4,256], index: 0, kind: input, shape index: {}]
  %s1 = inlined_call_operand.vmem [shape: f32[4,1], index: 1, kind: input, shape index: {}]
  %s2 = inlined_call_operand.<no memory space> [shape: f32[1,1], index: 2, kind: input, shape index: {}]
  %s3 = inlined_call_operand.vmem [shape: f32[2,1,256], index: 3, kind: output, shape index: {}]
  %s4 = sld [smem:[#allocation0]]
  $region45: #{ph_block.1} parent=0
    _
  %s6 = ssub.s32 1, %s4
  %s7 = scalar_select 0, %s6, %s4
  %8 = sst [smem:[#allocation2]] %s2
  loop: start=0, step=1, limit=4
  $region2: #{ph_block.1} parent=0 // loop_pre_header
    _
  $region3: #{ph_block.1} parent=0 // loop_header
    %s10 = sphi 0, %s14
    %p11 = scmp.ge.s32.totalorder %s10, 4
    %s17 = sphi 0, %s29
    %s18 = sphi 0, %s25
    %s19 = sphi 0, %s17
    %s20 = sphi 0, %s18
    %s21 = sphi 0, %s19
    %s22 = sphi 0, %s20
    %s34 = sphi 0, %s36
    %s37 = sphi 0, %s34
    %s38 = sphi 0, %s37
    %s54 = sphi 0, %s38
    %s58 = sphi 0, %s58
    %s60 = sphi 0, %s58
    %s61 = sphi 0, %s60
    %s75 = sphi 0, %s61
    %s79 = sphi 0, %s79
    %s81 = sphi 0, %s79
    %s82 = sphi 0, %s81
    %s96 = sphi 0, %s82
    %s104 = sphi 0, %s106
    %s107 = sphi 0, %s104
    %s108 = sphi 0, %s107
    %s124 = sphi 0, %s108
  $region4: #{ph_block.1} parent=0 // loop_header_branch
    %13 = sbr.rel (%p11) target = $region8
  $region5: #{ph_block.1} parent=0 // loop_body
    %s15 = ssub.s32 %s10, 1
    %s16 = ssub.s32 %s10, 2
    %s23 = sadd.s32 1, %s18
    %p24 = scmp.ge.s32.totalorder %s23, 1
    %s25 = scalar_select %p24, 0, %s23
    %s26 = sadd.s32 1, %s17
    %s27 = scalar_select %p24, %s26, %s17
    %p28 = scmp.ge.s32.totalorder %s27, 2
    %s29 = scalar_select %p28, 0, %s27
    %s30 = ssub.s32 %s17, %s29
    %s31 = ssub.s32 %s18, %s25
    %s32 = sor.u32 %s30, %s31
    %p33 = scmp.eq.s32.totalorder %s32, 0
    %s35 = sadd.s32 %s34, 1
    %s36 = scalar_select %p33, %s34, %s35
    %p39 = pneg %p33
    %p40 = scmp.eq.s32.totalorder %s10, 1
    %p41 = por %p39, %p40
    %p42 = scmp.ne.s32.totalorder %s34, %s37
    %p43 = scmp.eq.s32.totalorder %s10, 0
    %p44 = por %p42, %p43
    %p45 = scmp.ne.s32.totalorder %s34, %s37
    %p46 = scmp.eq.s32.totalorder %s15, 1
    %p47 = por %p45, %p46
    %p48 = scmp.ne.s32.totalorder %s37, %s38
    %p49 = scmp.eq.s32.totalorder %s15, 0
    %p50 = por %p48, %p49
    %p51 = scmp.ne.s32.totalorder %s37, %s38
    %p52 = scmp.eq.s32.totalorder %s16, 1
    %p53 = por %p51, %p52
    %p55 = scmp.ne.s32.totalorder %s38, %s54
    %p56 = scmp.eq.s32.totalorder %s16, 0
    %p57 = por %p55, %p56
    %s59 = sadd.s32 %s58, 1
    %p62 = scmp.eq.s32.totalorder %s10, 1
    %p63 = scmp.ne.s32.totalorder %s58, %s60
    %p64 = scmp.eq.s32.totalorder %s10, 0
    %p65 = por %p63, %p64
    %p66 = scmp.ne.s32.totalorder %s58, %s60
    %p67 = scmp.eq.s32.totalorder %s15, 1
    %p68 = por %p66, %p67
    %p69 = scmp.ne.s32.totalorder %s60, %s61
    %p70 = scmp.eq.s32.totalorder %s15, 0
    %p71 = por %p69, %p70
    %p72 = scmp.ne.s32.totalorder %s60, %s61
    %p73 = scmp.eq.s32.totalorder %s16, 1
    %p74 = por %p72, %p73
    %p76 = scmp.ne.s32.totalorder %s61, %s75
    %p77 = scmp.eq.s32.totalorder %s16, 0
    %p78 = por %p76, %p77
    %s80 = sadd.s32 %s79, 1
    %p83 = scmp.eq.s32.totalorder %s10, 1
    %p84 = scmp.ne.s32.totalorder %s79, %s81
    %p85 = scmp.eq.s32.totalorder %s10, 0
    %p86 = por %p84, %p85
    %p87 = scmp.ne.s32.totalorder %s79, %s81
    %p88 = scmp.eq.s32.totalorder %s15, 1
    %p89 = por %p87, %p88
    %p90 = scmp.ne.s32.totalorder %s81, %s82
    %p91 = scmp.eq.s32.totalorder %s15, 0
    %p92 = por %p90, %p91
    %p93 = scmp.ne.s32.totalorder %s81, %s82
    %p94 = scmp.eq.s32.totalorder %s16, 1
    %p95 = por %p93, %p94
    %p97 = scmp.ne.s32.totalorder %s82, %s96
    %p98 = scmp.eq.s32.totalorder %s16, 0
    %p99 = por %p97, %p98
    %s100 = ssub.s32 %s17, %s29
    %s101 = ssub.s32 %s18, %s25
    %s102 = sor.u32 %s100, %s101
    %p103 = scmp.eq.s32.totalorder %s102, 0
    %s105 = sadd.s32 %s104, 1
    %s106 = scalar_select %p103, %s104, %s105
    %p109 = pneg %p103
    %p110 = scmp.eq.s32.totalorder %s10, 1
    %p111 = por %p109, %p110
    %p112 = scmp.ne.s32.totalorder %s104, %s107
    %p113 = scmp.eq.s32.totalorder %s10, 0
    %p114 = por %p112, %p113
    %p115 = scmp.ne.s32.totalorder %s104, %s107
    %p116 = scmp.eq.s32.totalorder %s15, 1
    %p117 = por %p115, %p116
    %p118 = scmp.ne.s32.totalorder %s107, %s108
    %p119 = scmp.eq.s32.totalorder %s15, 0
    %p120 = por %p118, %p119
    %p121 = scmp.ne.s32.totalorder %s107, %s108
    %p122 = scmp.eq.s32.totalorder %s16, 1
    %p123 = por %p121, %p122
    %p125 = scmp.ne.s32.totalorder %s108, %s124
    %p126 = scmp.eq.s32.totalorder %s16, 0
    %p127 = por %p125, %p126
    %p128 = scmp.le.s32.totalorder 1, %s10
    %p129 = scmp.lt.s32.totalorder %s10, 3
    %p130 = pnand %p128, %p129
    %p131 = pneg %p130
    // Predicated region
    $region9: #{ph_block.1} parent=5 // pred_check
      _
    $region10: #{ph_block.1} parent=5 // pred_check_branch
      %133 = sbr.rel (%p130) target = $region12
    $region11: #{ph_block.1} parent=5 // pred_region
      %s134 = ssub.s32 %s10, 1
      // Predicated region
      $region13: #{ph_block.1} parent=11 // pred_check
        %p135 = pneg %p71
      $region14: #{ph_block.1} parent=11 // pred_check_branch
        %137 = sbr.rel (%p135) target = $region16
      $region15: #{ph_block.1} parent=11 // pred_region
        _
      $region16: #{ph_block.1} parent=11 // pred_fallthru
        _
      // Predicated region
      $region17: #{ph_block.1} parent=11 // pred_check
        %p138 = pneg %p92
      $region18: #{ph_block.1} parent=11 // pred_check_branch
        %140 = sbr.rel (%p138) target = $region20
      $region19: #{ph_block.1} parent=11 // pred_region
        _
      $region20: #{ph_block.1} parent=11 // pred_fallthru
        _
    $region12: #{ph_block.1} parent=5 // pred_fallthru
      _
    %p141 = scmp.lt.s32.totalorder %s10, 2
    // Predicated region
    $region21: #{ph_block.1} parent=5 // pred_check
      %p142 = pneg %p141
    $region22: #{ph_block.1} parent=5 // pred_check_branch
      %144 = sbr.rel (%p142) target = $region24
    $region23: #{ph_block.1} parent=5 // pred_region
      // Predicated region
      $region25: #{ph_block.1} parent=23 // pred_check
        %p145 = pneg %p44
      $region26: #{ph_block.1} parent=23 // pred_check_branch
        %147 = sbr.rel (%p145) target = $region28
      $region27: #{ph_block.1} parent=23 // pred_region
        %s148 = smul.u32 2, %s18
        %p149 = scmp.lt.s32.totalorder %s17, 1
        %s150 = scalar_select %p149, %s17, 1
        %p151 = scmp.lt.s32.totalorder %s148, 1
        %s152 = scalar_select %p151, %s148, 1
        %s153 = smul.addr %s150, 2
        %s154 = sadd.s32 %s152, %s153
        %s155 = smul.addr %s154, 4
        %s156 = scalar_lea.vmem %s0, %s155
        %s157 = smul.u32 2, %s18
      $region28: #{ph_block.1} parent=23 // pred_fallthru
        _
    $region24: #{ph_block.1} parent=5 // pred_fallthru
      _
    %p158 = scmp.le.s32.totalorder 1, %s10
    %p159 = scmp.lt.s32.totalorder %s10, 3
    %p160 = pnand %p158, %p159
    %p161 = pneg %p160
    // Predicated region
    $region29: #{ph_block.1} parent=5 // pred_check
      _
    $region30: #{ph_block.1} parent=5 // pred_check_branch
      %163 = sbr.rel (%p160) target = $region32
    $region31: #{ph_block.1} parent=5 // pred_region
      %s164 = ssub.s32 %s10, 1
      %s165 = smul.u32 2, %s20
      %p166 = scmp.lt.s32.totalorder %s19, 1
      %s167 = scalar_select %p166, %s19, 1
      %p168 = scmp.lt.s32.totalorder %s165, 1
      %s169 = scalar_select %p168, %s165, 1
      %s170 = smul.addr %s167, 2
      %s171 = sadd.s32 %s169, %s170
      %s172 = smul.addr %s171, 4
      %s173 = scalar_lea.vmem %s0, %s172
      %p174 = pneg %p50
      %p175 = pneg %p47
      %p176 = pneg %p71
      %p177 = pneg %p68
      %p178 = pneg %p92
      %p179 = pneg %p89
      %p180 = pneg %p120
      %p181 = pneg %p117
      %s182 = smul.u32 2, %s20
      %p183 = scmp.lt.s32.totalorder %s19, 1
      %s184 = scalar_select %p183, %s19, 1
      %p185 = scmp.lt.s32.totalorder %s182, 1
      %s186 = scalar_select %p185, %s182, 1
      %s187 = smul.addr %s184, 2
      %s188 = sadd.s32 %s186, %s187
      %s189 = scalar_lea.vmem %s3, %s188
      %s190 = smul.u32 2, %s20
      %p191 = scmp.lt.s32.totalorder %s19, 1
      %s192 = scalar_select %p191, %s19, 1
      %p193 = scmp.lt.s32.totalorder %s190, 1
      %s194 = scalar_select %p193, %s190, 1
      %s195 = smul.addr %s192, 2
      %s196 = sadd.s32 %s194, %s195
      %s197 = smul.addr %s196, 4
      %s198 = scalar_lea.vmem %s0, %s197
      %s199 = smul.u32 2, %s20
      %s200 = smul.u32 2, %s20
      %p201 = scmp.lt.s32.totalorder %s19, 1
      %s202 = scalar_select %p201, %s19, 1
      %p203 = scmp.lt.s32.totalorder %s200, 1
      %s204 = scalar_select %p203, %s200, 1
      %s205 = smul.addr %s202, 2
      %s206 = sadd.s32 %s204, %s205
      %s207 = scalar_lea.vmem %s3, %s206
      %s208 = smul.u32 2, %s20
      %v209 = vld [vmem:[%s198] sm:$0xff]
      %v210 = vld [vmem:[%s1] sm:$0xf]
      %212 = vset.pattern.permute.xlu0 0
      %213 = vperm.xlu0 %212, %v210
      %v214 = vpop.permute.xlu0 %213
      %v216 = vunpack.c.l.s4 839922192
      %v217 = vunpack.c.0.s8 %v216
      %v218 = vlaneseq
      %v219 = vshrl.u32 %v218, 7
      %v220 = vsub.s32 %v217, %v219
      %v221 = vrot.slane %v214, %v220
      %v223 = vmul.f32 %v209, %v221
      %v225 = vcombine.high %v223, %v223
      %vm227 = vcmask 1043456
      %v228 = vsel %vm227, %v223, 0.0
      %v229 = vrot.slane %v228, 4
      %v230 = vadd.f32 %v228, %v229
      %v231 = vrot.slane %v230, 2
      %v232 = vadd.f32 %v230, %v231
      %v233 = vrot.slane %v232, 1
      %v234 = vadd.f32 %v232, %v233
      %v235 = vsel %vm227, %v225, 0.0
      %v236 = vrot.slane %v235, 4
      %v237 = vadd.f32 %v235, %v236
      %v238 = vrot.slane %v237, 2
      %v239 = vadd.f32 %v237, %v238
      %v240 = vrot.slane %v239, 1
      %v241 = vadd.f32 %v239, %v240
      %s242 = sld [smem:[#allocation2]]
      %v243 = vstv %s242
      %v244 = vadd.f32 %v234, %v243
      %v245 = vadd.f32 %v241, %v243
      %v246 = vxor.u32 %v244, 2147483648
      %v247 = vxor.u32 %v245, 2147483648
      %v248 = vmul.f32 %v246, 1.442695
      %v249 = vpow.pop %v248
      %v250 = vmul.f32 %v247, 1.442695
      %v251 = vpow.pop %v250
      %v252 = vadd.f32 %v249, 1.0
      %v253 = vadd.f32 %v251, 1.0
      %v254 = vrcp.pop %v252
      %v255 = vmul.f32 1.0, %v254
      %v256 = vrcp.pop %v253
      %v257 = vmul.f32 1.0, %v256
      %v260 = vcombine.low %v255, %v257
      %v262 = vunpack.c.l.s4 1966171168
      %v263 = vunpack.c.0.s8 %v262
      %v264 = vlaneseq
      %v265 = vshrl.u32 %v264, 7
      %v266 = vsub.s32 %v263, %v265
      %v267 = vrot.slane %v260, %v266
      %v269 = vunpack.c.l.s4 1966171168
      %v270 = vunpack.c.0.s8 %v269
      %v271 = vlaneseq
      %v272 = vshrl.u32 %v271, 7
      %v273 = vsub.s32 %v270, %v272
      %v274 = vrot.slane %v267, %v273
      %v276 = vlaneseq
      %vm277 = vcmp.ge.s32.totalorder %v276, 0
      %vm278 = vcmp.lt.s32.totalorder %v276, 256
      %vm279 = vmand %vm277, %vm278
      %280 = vst.msk [vmem:[%s207] sm:$0x3] %vm279, %v274
      %s281 = smul.u32 2, %s20
      %p282 = scmp.lt.s32.totalorder %s19, 1
      %s283 = scalar_select %p282, %s19, 1
      %p284 = scmp.lt.s32.totalorder %s281, 1
      %s285 = scalar_select %p284, %s281, 1
      %s286 = smul.addr %s283, 2
      %s287 = sadd.s32 %s285, %s286
      %s288 = scalar_lea.vmem %s3, %s287
      // Predicated region
      $region33: #{ph_block.1} parent=31 // pred_check
        %p289 = pneg %p117
      $region34: #{ph_block.1} parent=31 // pred_check_branch
        %291 = sbr.rel (%p289) target = $region36
      $region35: #{ph_block.1} parent=31 // pred_region
        %s292 = smul.u32 2, %s20
      $region36: #{ph_block.1} parent=31 // pred_fallthru
        _
    $region32: #{ph_block.1} parent=5 // pred_fallthru
      _
    %p293 = scmp.le.s32.totalorder 2, %s10
    // Predicated region
    $region37: #{ph_block.1} parent=5 // pred_check
      %p294 = pneg %p293
    $region38: #{ph_block.1} parent=5 // pred_check_branch
      %296 = sbr.rel (%p294) target = $region40
    $region39: #{ph_block.1} parent=5 // pred_region
      %s297 = ssub.s32 %s10, 2
      // Predicated region
      $region41: #{ph_block.1} parent=39 // pred_check
        %p298 = pneg %p123
      $region42: #{ph_block.1} parent=39 // pred_check_branch
        %300 = sbr.rel (%p298) target = $region44
      $region43: #{ph_block.1} parent=39 // pred_region
        %s301 = smul.u32 2, %s22
        %p302 = scmp.lt.s32.totalorder %s21, 1
        %s303 = scalar_select %p302, %s21, 1
        %p304 = scmp.lt.s32.totalorder %s301, 1
        %s305 = scalar_select %p304, %s301, 1
        %s306 = smul.addr %s303, 2
        %s307 = sadd.s32 %s305, %s306
        %s308 = scalar_lea.vmem %s3, %s307
      $region44: #{ph_block.1} parent=39 // pred_fallthru
        _
    $region40: #{ph_block.1} parent=5 // pred_fallthru
      _
  $region6: #{ph_block.1} parent=0 // loop_footer
    %s14 = sadd.s32 1, %s10
  $region7: #{ph_block.1} parent=0 // loop_footer_branch
    %9 = sbr.rel target = $region3
  $region8: #{ph_block.1} parent=0 // loop_exit
    _

</llo_original>
